<compile_context>
chip_gen: v5e
topology: v5e:2x2
jax: 0.10.0
libtpu: 0.0.40
codegen_flags: <defaults>
</compile_context>

<pallas_src>
import functools

import jax
import jax.numpy as jnp
import numpy as np
from jax.experimental import pallas as pl
from jax.experimental.pallas import tpu as pltpu


def _resnet_block_kernel(mismatch, tail_dt, t_out, *refs):
    if mismatch:
        x_ref, w1_ref, w2_ref, wm_ref, sel_ref, b1_ref, b2_ref, a_ref, o_ref = refs
    else:
        x_ref, w1_ref, w2_ref, sel_ref, b1_ref, b2_ref, a_ref, o_ref = refs
        wm_ref = None

    c_in = x_ref.shape[1]
    L = x_ref.shape[2]              # full-rate time lanes in this block (= 3 * tt)
    tt = o_ref.shape[2]             # output time lanes in this block
    gB = sel_ref.shape[2]           # pool-compaction group width
    use_roll = (L % 128) == 0

    xb = x_ref[0]                   # (C_in, L), original input dtype

    # Only when the last time block is partial: zero lanes beyond the valid range so
    # undefined DMA padding cannot poison valid outputs through 0 * NaN in the
    # selection matmul.
    if t_out % tt != 0:
        valid = 3 * (t_out - pl.program_id(1) * tt)
        lane = jax.lax.broadcasted_iota(jnp.int32, (c_in, L), 1)
        xb = jnp.where(lane < valid, xb, 0)

    xb16 = xb.astype(jnp.bfloat16)

    # Hoisted scalar / bias loads (single full-rate pass; no per-position loop remains).
    a1 = a_ref[0].astype(tail_dt)
    a2 = a_ref[1].astype(tail_dt)
    b1 = b1_ref[...].astype(tail_dt)        # (C_out, 1)
    b2 = b2_ref[...].astype(tail_dt)

    # Conv1d(k=1, BN1 scale folded into w1) -> BN1 shift -> PReLU.
    h = jnp.dot(w1_ref[...], xb16, preferred_element_type=jnp.float32).astype(tail_dt)
    h = h + b1
    h = jnp.where(h >= 0, h, a1 * h)

    # Conv1d(k=1, BN2 scale folded); shortcut conv accumulated into the same f32 result.
    acc = jnp.dot(w2_ref[...], h.astype(jnp.bfloat16),
                  preferred_element_type=jnp.float32)
    if mismatch:
        acc = acc + jnp.dot(wm_ref[...], xb16, preferred_element_type=jnp.float32)
    y = acc.astype(tail_dt) + b2
    if not mismatch:
        y = y + xb.astype(tail_dt)          # identity shortcut
    y = jnp.where(y >= 0, y, a2 * y)        # tail PReLU

    # MaxPool1d(3).
    if use_roll:
        # Windowed max via two lane rotations, then one blocked selection matmul per
        # 128-lane output group compacting every third lane.
        m = jnp.maximum(y, pltpu.roll(y, shift=L - 1, axis=1))
        m = jnp.maximum(m, pltpu.roll(y, shift=L - 2, axis=1))
        m16 = m.astype(jnp.bfloat16)
        sel0 = sel_ref[0]
        for g in range(tt // gB):
            mg = m16[:, g * 3 * gB:(g + 1) * 3 * gB]
            og = jnp.dot(mg, sel0, preferred_element_type=jnp.float32)
            o_ref[0, :, g * gB:(g + 1) * gB] = og.astype(o_ref.dtype)
    else:
        # Tiny-T fallback (no lane rolls): three selection matmuls (one per window
        # offset) followed by an elementwise max.
        y16 = y.astype(jnp.bfloat16)
        for g in range(tt // gB):
            yg = y16[:, g * 3 * gB:(g + 1) * 3 * gB]
            og = None
            for k in range(3):
                zk = jnp.dot(yg, sel_ref[k], preferred_element_type=jnp.float32)
                og = zk if og is None else jnp.maximum(og, zk)
            o_ref[0, :, g * gB:(g + 1) * gB] = og.astype(o_ref.dtype)


def _device_config():
    kind = ""
    try:
        d = jax.devices()[0]
        if d.platform == "tpu":
            kind = d.device_kind.lower()
    except Exception:
        pass
    if "v7" in kind:     # 64 MiB VMEM / TC, 2 TCs, bf16 VALU
        return {"tail_dt": jnp.bfloat16, "vmem_cap": 48 * 2**20, "min_parallel": 2}
    if "v6" in kind:     # 128 MiB VMEM, bf16 VALU
        return {"tail_dt": jnp.bfloat16, "vmem_cap": 96 * 2**20, "min_parallel": 1}
    if "v4" in kind or "v5" in kind:   # no bf16 VALU -> keep f32 elementwise tail
        return {"tail_dt": jnp.float32, "vmem_cap": 96 * 2**20, "min_parallel": 1}
    return {"tail_dt": jnp.float32, "vmem_cap": 32 * 2**20, "min_parallel": 1}


def _vmem_need(tt, gB, c_in, c_out, mismatch, x_itemsize):
    xblk = c_in * 3 * tt * x_itemsize
    oblk = c_out * tt * 4
    wts = 2 * (c_out * c_in + c_out * c_out + (c_out * c_in if mismatch else 0))
    bias = 2 * c_out * 128 * 4              # (C_out, 1) f32 blocks pad lanes to 128
    sel = 3 * 3 * gB * gB * 2
    inter = 6 * c_out * 3 * tt * 4          # live h / acc / y / m intermediates
    return 2 * (xblk + oblk + wts + bias + sel) + inter + (2 << 20)


def _choose_time_tile(t_out, c_in, c_out, mismatch, x_itemsize, vmem_cap, max_tile):
    if t_out < 128:
        return t_out, t_out                 # single tiny block, roll-free pool path
    cap_tt = pl.cdiv(t_out, 128) * 128
    for tt in (2048, 1024, 512, 256, 128):
        if tt > max_tile or tt > cap_tt:
            continue
        if _vmem_need(tt, 128, c_in, c_out, mismatch, x_itemsize) <= vmem_cap:
            return tt, 128
    return 128, 128


def resnet_block_forward(x_nct, p, *, max_tile=2048, out_dtype=None):
    """x_nct: (N, C_in, T) in PyTorch NCT layout.  Returns (N, C_out, T // 3)."""
    n, c_in, t = x_nct.shape
    c_out = p["w1"].shape[0]
    t_out = t // 3                          # MaxPool1d(3): trailing samples dropped
    mismatch = c_in != c_out
    eps = 1e-5
    cfg = _device_config()
    out_dtype = x_nct.dtype if out_dtype is None else out_dtype

    # Fold BatchNorm (eval mode) into conv weight scales + per-channel shifts.
    s1 = p["g1"] / jnp.sqrt(p["v1"] + eps)
    s2 = p["g2"] / jnp.sqrt(p["v2"] + eps)
    b1 = (p["b1"] - p["m1"] * s1).astype(jnp.float32).reshape(c_out, 1)
    b2 = (p["b2"] - p["m2"] * s2).astype(jnp.float32).reshape(c_out, 1)
    w1 = (p["w1"] * s1[:, None]).astype(jnp.bfloat16)        # (C_out, C_in)
    w2 = (p["w2"] * s2[:, None]).astype(jnp.bfloat16)        # (C_out, C_out)
    a = jnp.array([p["a1"], p["a2"]], jnp.float32)           # PReLU slopes (head, tail)

    tt, gB = _choose_time_tile(t_out, c_in, c_out, mismatch,
                               x_nct.dtype.itemsize, cfg["vmem_cap"], max_tile)
    # v7x has two TensorCores: keep >= 2 parallel grid steps when the shape allows it.
    while (cfg["min_parallel"] > 1 and n * pl.cdiv(t_out, tt) < cfg["min_parallel"]
           and tt > 128):
        tt //= 2
    grid = (n, pl.cdiv(t_out, tt))

    # Blocked 0/1 selection matrices for the pool compaction: sel[k, i, t] = 1 iff i == 3t+k.
    i_idx = np.arange(3 * gB)[:, None]
    t_idx = np.arange(gB)[None, :]
    sel = jnp.asarray(
        np.stack([(i_idx == 3 * t_idx + k) for k in range(3)]).astype(np.float32),
        dtype=jnp.bfloat16)                                   # (3, 3*gB, gB)

    def cspec(shape):
        return pl.BlockSpec(shape, lambda *idx: (0,) * len(shape))

    in_specs = [pl.BlockSpec((1, c_in, 3 * tt), lambda i, j: (i, 0, j)),
                cspec((c_out, c_in)),
                cspec((c_out, c_out))]
    args = [x_nct, w1, w2]
    if mismatch:
        in_specs.append(cspec((c_out, c_in)))
        args.append(p["wm"].astype(jnp.bfloat16))
    in_specs += [cspec((3, 3 * gB, gB)),
                 cspec((c_out, 1)),
                 cspec((c_out, 1)),
                 pl.BlockSpec(memory_space=pltpu.MemorySpace.SMEM)]
    args += [sel, b1, b2, a]

    need = _vmem_need(tt, gB, c_in, c_out, mismatch, x_nct.dtype.itemsize)
    vmem_limit = int(min(cfg["vmem_cap"], max(need, 32 * 2**20)))

    kern = functools.partial(_resnet_block_kernel, mismatch, cfg["tail_dt"], t_out)

    out = pl.pallas_call(
        kern,
        out_shape=jax.ShapeDtypeStruct((n, c_out, t_out), out_dtype),
        grid_spec=pltpu.PrefetchScalarGridSpec(
            num_scalar_prefetch=0,
            grid=grid,
            in_specs=in_specs,
            out_specs=pl.BlockSpec((1, c_out, tt), lambda i, j: (i, 0, j)),
        ),
        compiler_params=pltpu.CompilerParams(
            dimension_semantics=("parallel", "parallel"),
            vmem_limit_bytes=vmem_limit),
    )(*args)

    return out                                                # (N, C_out, T_out) NCT


def resnet_block_ref(x, p, eps=1e-5):
    """Pure-JAX f32 reference matching the PyTorch forward (BN in eval mode)."""
    def conv(y, w):
        return jnp.einsum('oc,nct->not', w, y)

    def bn(y, g, b, m, v):
        s = g / jnp.sqrt(v + eps)
        return y * s[None, :, None] + (b - m * s)[None, :, None]

    def prelu(y, a):
        return jnp.where(y >= 0, y, a * y)

    c_out, c_in = p["w1"].shape
    h = prelu(bn(conv(x, p["w1"]), p["g1"], p["b1"], p["m1"], p["v1"]), p["a1"])
    h = bn(conv(h, p["w2"]), p["g2"], p["b2"], p["m2"], p["v2"])
    h = h + (conv(x, p["wm"]) if c_in != c_out else x)
    h = prelu(h, p["a2"])
    n, c, t = h.shape
    to = t // 3
    return jnp.max(h[:, :, :to * 3].reshape(n, c, to, 3), axis=-1)


def make_params(key, c_in, c_out):
    ks = jax.random.split(key, 11)
    p = dict(
        # Conv1d weights in PyTorch layout (out_channels, in_channels), k=1 squeezed
        w1=0.3 * jax.random.normal(ks[0], (c_out, c_in), jnp.float32),
        w2=0.3 * jax.random.normal(ks[1], (c_out, c_out), jnp.float32),
        # BatchNorm1d #1: gamma / beta / running_mean / running_var
        g1=1.0 + 0.1 * jax.random.normal(ks[2], (c_out,), jnp.float32),
        b1=0.1 * jax.random.normal(ks[3], (c_out,), jnp.float32),
        m1=0.05 * jax.random.normal(ks[4], (c_out,), jnp.float32),
        v1=1.0 + 0.1 * jax.random.uniform(ks[5], (c_out,), jnp.float32),
        # BatchNorm1d #2
        g2=1.0 + 0.1 * jax.random.normal(ks[6], (c_out,), jnp.float32),
        b2=0.1 * jax.random.normal(ks[7], (c_out,), jnp.float32),
        m2=0.05 * jax.random.normal(ks[8], (c_out,), jnp.float32),
        v2=1.0 + 0.1 * jax.random.uniform(ks[9], (c_out,), jnp.float32),
        # PReLU params (PyTorch default init = 0.25, single shared parameter)
        a1=jnp.float32(0.25),
        a2=jnp.float32(0.25),
    )
    if c_in != c_out:
        p["wm"] = 0.3 * jax.random.normal(ks[10], (c_out, c_in), jnp.float32)
    return p


if __name__ == "__main__":
    key = jax.random.PRNGKey(0)
    k_x1, k_p1, k_x2, k_p2 = jax.random.split(key, 4)

    # Case 1: channel mismatch (shortcut conv); T not divisible by 3 or by the time tile.
    # N=2, C_in=4, C_out=8, T=779 -> T_out=259, Tt=256, grid (2, 2) with a masked tail
    # block, roll-based pool path.
    x1 = jax.random.normal(k_x1, (2, 4, 779), jnp.float32)
    p1 = make_params(k_p1, 4, 8)
    out1 = jax.block_until_ready(resnet_block_forward(x1, p1))
    ref1 = resnet_block_ref(x1, p1)
    np.testing.assert_allclose(np.asarray(out1), np.asarray(ref1), atol=3e-2, rtol=3e-2)

    # Case 2: matched channels (identity shortcut), tiny T.  N=2, C=8, T=96 -> T_out=32
    # (single block, roll-free pool path).
    x2 = jax.random.normal(k_x2, (2, 8, 96), jnp.float32)
    p2 = make_params(k_p2, 8, 8)
    out2 = jax.block_until_ready(resnet_block_forward(x2, p2))
    ref2 = resnet_block_ref(x2, p2)
    np.testing.assert_allclose(np.asarray(out2), np.asarray(ref2), atol=3e-2, rtol=3e-2)

    print("KERNEL_OK")
</pallas_src>

<mosaic_0001>
module attributes {stable_mosaic.version = 11 : i64} {
  func.func @_resnet_block_kernel(%arg0: i32, %arg1: i32, %arg2: memref<1x4x768xf32, #tpu.memory_space<vmem>>, %arg3: memref<8x4xbf16, #tpu.memory_space<vmem>>, %arg4: memref<8x8xbf16, #tpu.memory_space<vmem>>, %arg5: memref<8x4xbf16, #tpu.memory_space<vmem>>, %arg6: memref<3x384x128xbf16, #tpu.memory_space<vmem>>, %arg7: memref<8x1xf32, #tpu.memory_space<vmem>>, %arg8: memref<8x1xf32, #tpu.memory_space<vmem>>, %arg9: memref<2xf32, #tpu.memory_space<smem>>, %arg10: memref<1x8x256xf32, #tpu.memory_space<vmem>>) attributes {dimension_semantics = [#tpu.dimension_semantics<parallel>, #tpu.dimension_semantics<parallel>], iteration_bounds = array<i64: 2, 2>, scalar_prefetch = 0 : i64, scratch_operands = 0 : i64, tpu.core_type = #tpu.core_type<tc>, window_params = [{transform_indices = @transform_0, window_bounds = array<i64: 1, 4, 768>}, {pipeline_mode = #tpu.pipeline_mode<synchronous>, transform_indices = @transform_1, window_bounds = array<i64: 8, 4>}, {pipeline_mode = #tpu.pipeline_mode<synchronous>, transform_indices = @transform_2, window_bounds = array<i64: 8, 8>}, {pipeline_mode = #tpu.pipeline_mode<synchronous>, transform_indices = @transform_3, window_bounds = array<i64: 8, 4>}, {pipeline_mode = #tpu.pipeline_mode<synchronous>, transform_indices = @transform_4, window_bounds = array<i64: 3, 384, 128>}, {pipeline_mode = #tpu.pipeline_mode<synchronous>, transform_indices = @transform_5, window_bounds = array<i64: 8, 1>}, {pipeline_mode = #tpu.pipeline_mode<synchronous>, transform_indices = @transform_6, window_bounds = array<i64: 8, 1>}, {transform_indices = @transform_7, window_bounds = array<i64: 2>}, {transform_indices = @transform_8, window_bounds = array<i64: 1, 8, 256>}]} {
    %c0 = arith.constant 0 : index
    %c0_0 = arith.constant 0 : index
    %c0_1 = arith.constant 0 : index
    %0 = vector.load %arg2[%c0, %c0_0, %c0_1] : memref<1x4x768xf32, #tpu.memory_space<vmem>>, vector<1x4x768xf32>
    %1 = vector.shape_cast %0 : vector<1x4x768xf32> to vector<4x768xf32>
    %c256_i32 = arith.constant 256 : i32
    %2 = arith.muli %arg1, %c256_i32 : i32
    %c259_i32 = arith.constant 259 : i32
    %3 = arith.subi %c259_i32, %2 : i32
    %c3_i32 = arith.constant 3 : i32
    %4 = arith.muli %c3_i32, %3 : i32
    %5 = tpu.iota {dimensions = array<i32: 1>} : vector<4x768xi32>
    %6 = vector.broadcast %4 : i32 to vector<4x768xi32>
    %7 = arith.cmpi slt, %5, %6 : vector<4x768xi32>
    %c0_i32 = arith.constant 0 : i32
    %8 = arith.sitofp %c0_i32 : i32 to f32
    %9 = vector.broadcast %8 : f32 to vector<4x768xf32>
    %10 = arith.select %7, %1, %9 : vector<4x768xi1>, vector<4x768xf32>
    %11 = arith.truncf %10 : vector<4x768xf32> to vector<4x768xbf16>
    %c0_2 = arith.constant 0 : index
    %12 = memref.load %arg9[%c0_2] : memref<2xf32, #tpu.memory_space<smem>>
    %c1 = arith.constant 1 : index
    %13 = memref.load %arg9[%c1] : memref<2xf32, #tpu.memory_space<smem>>
    %c0_3 = arith.constant 0 : index
    %c0_4 = arith.constant 0 : index
    %14 = vector.load %arg7[%c0_3, %c0_4] : memref<8x1xf32, #tpu.memory_space<vmem>>, vector<8x1xf32>
    %c0_5 = arith.constant 0 : index
    %c0_6 = arith.constant 0 : index
    %15 = vector.load %arg8[%c0_5, %c0_6] : memref<8x1xf32, #tpu.memory_space<vmem>>, vector<8x1xf32>
    %c0_7 = arith.constant 0 : index
    %c0_8 = arith.constant 0 : index
    %16 = vector.load %arg3[%c0_7, %c0_8] : memref<8x4xbf16, #tpu.memory_space<vmem>>, vector<8x4xbf16>
    %cst = arith.constant dense<0.000000e+00> : vector<8x768xf32>
    %17 = tpu.matmul %16, %11, %cst {dimension_numbers = #tpu.dot_dimension_numbers<[1], [0], [0], [1], [0, 0, 1, 1], [], []>} : vector<8x4xbf16>, vector<4x768xbf16>, vector<8x768xf32> -> vector<8x768xf32>
    %18 = vector.broadcast %14 : vector<8x1xf32> to vector<8x768xf32>
    %19 = arith.addf %17, %18 : vector<8x768xf32>
    %cst_9 = arith.constant 0.000000e+00 : f32
    %20 = vector.broadcast %cst_9 : f32 to vector<8x768xf32>
    %21 = arith.cmpf oge, %19, %20 : vector<8x768xf32>
    %22 = vector.broadcast %12 : f32 to vector<8x768xf32>
    %23 = arith.mulf %22, %19 : vector<8x768xf32>
    %24 = arith.select %21, %19, %23 : vector<8x768xi1>, vector<8x768xf32>
    %c0_10 = arith.constant 0 : index
    %c0_11 = arith.constant 0 : index
    %25 = vector.load %arg4[%c0_10, %c0_11] : memref<8x8xbf16, #tpu.memory_space<vmem>>, vector<8x8xbf16>
    %26 = arith.truncf %24 : vector<8x768xf32> to vector<8x768xbf16>
    %cst_12 = arith.constant dense<0.000000e+00> : vector<8x768xf32>
    %27 = tpu.matmul %25, %26, %cst_12 {dimension_numbers = #tpu.dot_dimension_numbers<[1], [0], [0], [1], [0, 0, 1, 1], [], []>} : vector<8x8xbf16>, vector<8x768xbf16>, vector<8x768xf32> -> vector<8x768xf32>
    %c0_13 = arith.constant 0 : index
    %c0_14 = arith.constant 0 : index
    %28 = vector.load %arg5[%c0_13, %c0_14] : memref<8x4xbf16, #tpu.memory_space<vmem>>, vector<8x4xbf16>
    %cst_15 = arith.constant dense<0.000000e+00> : vector<8x768xf32>
    %29 = tpu.matmul %28, %11, %cst_15 {dimension_numbers = #tpu.dot_dimension_numbers<[1], [0], [0], [1], [0, 0, 1, 1], [], []>} : vector<8x4xbf16>, vector<4x768xbf16>, vector<8x768xf32> -> vector<8x768xf32>
    %30 = arith.addf %27, %29 : vector<8x768xf32>
    %31 = vector.broadcast %15 : vector<8x1xf32> to vector<8x768xf32>
    %32 = arith.addf %30, %31 : vector<8x768xf32>
    %cst_16 = arith.constant 0.000000e+00 : f32
    %33 = vector.broadcast %cst_16 : f32 to vector<8x768xf32>
    %34 = arith.cmpf oge, %32, %33 : vector<8x768xf32>
    %35 = vector.broadcast %13 : f32 to vector<8x768xf32>
    %36 = arith.mulf %35, %32 : vector<8x768xf32>
    %37 = arith.select %34, %32, %36 : vector<8x768xi1>, vector<8x768xf32>
    %c767_i32 = arith.constant 767 : i32
    %38 = tpu.dynamic_rotate %37 by %c767_i32 dim 1 : vector<8x768xf32>, i32 -> vector<8x768xf32>
    %39 = arith.maximumf %37, %38 : vector<8x768xf32>
    %c766_i32 = arith.constant 766 : i32
    %40 = tpu.dynamic_rotate %37 by %c766_i32 dim 1 : vector<8x768xf32>, i32 -> vector<8x768xf32>
    %41 = arith.maximumf %39, %40 : vector<8x768xf32>
    %42 = arith.truncf %41 : vector<8x768xf32> to vector<8x768xbf16>
    %c0_17 = arith.constant 0 : index
    %c0_18 = arith.constant 0 : index
    %c0_19 = arith.constant 0 : index
    %43 = vector.load %arg6[%c0_17, %c0_18, %c0_19] : memref<3x384x128xbf16, #tpu.memory_space<vmem>>, vector<1x384x128xbf16>
    %44 = vector.shape_cast %43 : vector<1x384x128xbf16> to vector<384x128xbf16>
    %45 = vector.extract_strided_slice %42 {offsets = [0, 0], sizes = [8, 384], strides = [1, 1]} : vector<8x768xbf16> to vector<8x384xbf16>
    %cst_20 = arith.constant dense<0.000000e+00> : vector<8x128xf32>
    %46 = tpu.matmul %45, %44, %cst_20 {dimension_numbers = #tpu.dot_dimension_numbers<[1], [0], [0], [1], [0, 0, 1, 1], [], []>} : vector<8x384xbf16>, vector<384x128xbf16>, vector<8x128xf32> -> vector<8x128xf32>
    %c0_21 = arith.constant 0 : index
    %c0_22 = arith.constant 0 : index
    %c0_23 = arith.constant 0 : index
    %47 = vector.load %arg10[%c0_21, %c0_22, %c0_23] : memref<1x8x256xf32, #tpu.memory_space<vmem>>, vector<1x8x128xf32>
    %48 = vector.shape_cast %47 : vector<1x8x128xf32> to vector<8x128xf32>
    %49 = vector.shape_cast %46 : vector<8x128xf32> to vector<1x8x128xf32>
    tpu.vector_store %arg10[%c0_21, %c0_22, %c0_23], %49 {strides = array<i32>} : memref<1x8x256xf32, #tpu.memory_space<vmem>>, vector<1x8x128xf32>,
    %50 = vector.extract_strided_slice %42 {offsets = [0, 384], sizes = [8, 384], strides = [1, 1]} : vector<8x768xbf16> to vector<8x384xbf16>
    %cst_24 = arith.constant dense<0.000000e+00> : vector<8x128xf32>
    %51 = tpu.matmul %50, %44, %cst_24 {dimension_numbers = #tpu.dot_dimension_numbers<[1], [0], [0], [1], [0, 0, 1, 1], [], []>} : vector<8x384xbf16>, vector<384x128xbf16>, vector<8x128xf32> -> vector<8x128xf32>
    %c0_25 = arith.constant 0 : index
    %c0_26 = arith.constant 0 : index
    %c128 = arith.constant 128 : index
    %52 = vector.load %arg10[%c0_25, %c0_26, %c128] : memref<1x8x256xf32, #tpu.memory_space<vmem>>, vector<1x8x128xf32>
    %53 = vector.shape_cast %52 : vector<1x8x128xf32> to vector<8x128xf32>
    %54 = vector.shape_cast %51 : vector<8x128xf32> to vector<1x8x128xf32>
    tpu.vector_store %arg10[%c0_25, %c0_26, %c128], %54 {strides = array<i32>} : memref<1x8x256xf32, #tpu.memory_space<vmem>>, vector<1x8x128xf32>,
    return
  }
  func.func @transform_0(%arg0: i32, %arg1: i32) -> (i32, i32, i32) {
    %c0_i32 = arith.constant 0 : i32
    %c0_i32_0 = arith.constant 0 : i32
    return %arg0, %c0_i32, %arg1 : i32, i32, i32
  }
  func.func @transform_1(%arg0: i32, %arg1: i32) -> (i32, i32) {
    %c0_i32 = arith.constant 0 : i32
    %c0_i32_0 = arith.constant 0 : i32
    %c0_i32_1 = arith.constant 0 : i32
    return %c0_i32, %c0_i32_0 : i32, i32
  }
  func.func @transform_2(%arg0: i32, %arg1: i32) -> (i32, i32) {
    %c0_i32 = arith.constant 0 : i32
    %c0_i32_0 = arith.constant 0 : i32
    %c0_i32_1 = arith.constant 0 : i32
    return %c0_i32, %c0_i32_0 : i32, i32
  }
  func.func @transform_3(%arg0: i32, %arg1: i32) -> (i32, i32) {
    %c0_i32 = arith.constant 0 : i32
    %c0_i32_0 = arith.constant 0 : i32
    %c0_i32_1 = arith.constant 0 : i32
    return %c0_i32, %c0_i32_0 : i32, i32
  }
  func.func @transform_4(%arg0: i32, %arg1: i32) -> (i32, i32, i32) {
    %c0_i32 = arith.constant 0 : i32
    %c0_i32_0 = arith.constant 0 : i32
    %c0_i32_1 = arith.constant 0 : i32
    %c0_i32_2 = arith.constant 0 : i32
    return %c0_i32, %c0_i32_0, %c0_i32_1 : i32, i32, i32
  }
  func.func @transform_5(%arg0: i32, %arg1: i32) -> (i32, i32) {
    %c0_i32 = arith.constant 0 : i32
    %c0_i32_0 = arith.constant 0 : i32
    %c0_i32_1 = arith.constant 0 : i32
    return %c0_i32, %c0_i32_0 : i32, i32
  }
  func.func @transform_6(%arg0: i32, %arg1: i32) -> (i32, i32) {
    %c0_i32 = arith.constant 0 : i32
    %c0_i32_0 = arith.constant 0 : i32
    %c0_i32_1 = arith.constant 0 : i32
    return %c0_i32, %c0_i32_0 : i32, i32
  }
  func.func @transform_7(%arg0: i32, %arg1: i32) -> i32 {
    %c0_i32 = arith.constant 0 : i32
    %c0_i32_0 = arith.constant 0 : i32
    return %c0_i32 : i32
  }
  func.func @transform_8(%arg0: i32, %arg1: i32) -> (i32, i32, i32) {
    %c0_i32 = arith.constant 0 : i32
    %c0_i32_0 = arith.constant 0 : i32
    return %arg0, %c0_i32, %arg1 : i32, i32, i32
  }
}

</mosaic_0001>

<llo_original>
// kernel: tpu_custom_call.1
$region0: #{tpu_custom_call.1}
  #allocation0 [shape = 'u32[]', space=smem, size = 0x4, offset = 0x4, fixed_abs, tag = 'smem constant byte address 0x4 - core index']
  #allocation1 [shape = 'u32[72,128]{1,0:T(1,128)}', space=vmem, size = 0x9000, scoped, tag = 'internal scratch']
  %s0 = inlined_call_operand.hbm [shape: f32[2,4,779], index: 0, kind: input, shape index: {}]
  %s1 = inlined_call_operand.vmem [shape: bf16[8,4], index: 1, kind: input, shape index: {}]
  %s2 = inlined_call_operand.vmem [shape: bf16[8,8], index: 2, kind: input, shape index: {}]
  %s3 = inlined_call_operand.vmem [shape: bf16[8,4], index: 3, kind: input, shape index: {}]
  %s4 = inlined_call_operand.hbm [shape: bf16[3,384,128], index: 4, kind: input, shape index: {}]
  %s5 = inlined_call_operand.vmem [shape: f32[8,1], index: 5, kind: input, shape index: {}]
  %s6 = inlined_call_operand.vmem [shape: f32[8,1], index: 6, kind: input, shape index: {}]
  %s7 = inlined_call_operand.vmem [shape: f32[2], index: 7, kind: input, shape index: {}]
  %s8 = inlined_call_operand.hbm [shape: f32[2,8,259], index: 8, kind: output, shape index: {}]
  %s9 = sld [smem:[#allocation0]]
  $region77: #{tpu_custom_call.1} parent=0
    _
  %s11 = ssub.s32 1, %s9
  %s12 = scalar_select 0, %s11, %s9
  $region1: #{tpu_custom_call.1} parent=0
    #allocation2 [shape = 'u8[24576]{0}', space=vmem, size = 0x6000, scoped, tag = 'input window, operand 0']
    #allocation3 [shape = 's32[2]{0}', space=sflag, size = 0x8, scoped, tag = 'scoped memory for tpu_custom_call.1']
    #allocation4 [shape = 's32[2]{0}', space=sflag, size = 0x8, scoped, tag = 'scoped memory for tpu_custom_call.1']
    #allocation5 [shape = 's32[2]{0}', space=sflag, size = 0x8, scoped, tag = 'scoped memory for tpu_custom_call.1']
    #allocation6 [shape = 'u8[294912]{0}', space=vmem, size = 0x48000, scoped, tag = 'input window, operand 4, single buffered']
    #allocation7 [shape = 's32[1]{0}', space=sflag, size = 0x4, scoped, tag = 'scoped memory for tpu_custom_call.1']
    #allocation8 [shape = 'u8[512]{0}', space=smem, size = 0x200, scoped, tag = 'input window, operand 7, single buffered']
    #allocation9 [shape = 'u8[16384]{0}', space=vmem, size = 0x4000, scoped, tag = 'output window, operand 0']
    %13 = vsyncpa [#allocation3], 0
    %s14 = scalar_lea.sflag [#allocation3], 1
    %15 = vsyncpa %s14, 0
    %16 = vsyncpa [#allocation7], 0
    %17 = vsyncpa [#allocation5], 0
    %18 = vsyncpa [#allocation4], 0
    %s19 = scalar_lea.sflag [#allocation4], 1
    %20 = vsyncpa %s19, 0
    loop: start=0, step=1, limit=6
    $region2: #{tpu_custom_call.1} parent=1 // loop_pre_header
      _
    $region3: #{tpu_custom_call.1} parent=1 // loop_header
      %s22 = sphi 0, %s26
      %p23 = scmp.ge.s32.totalorder %s22, 6
      %s29 = sphi 0, %s41
      %s30 = sphi 0, %s37
      %s31 = sphi 0, %s29
      %s32 = sphi 0, %s30
      %s33 = sphi 0, %s31
      %s34 = sphi 0, %s32
      %s46 = sphi 0, %s48
      %s49 = sphi 0, %s46
      %s50 = sphi 0, %s49
      %s66 = sphi 0, %s50
      %s70 = sphi 0, %s70
      %s72 = sphi 0, %s70
      %s73 = sphi 0, %s72
      %s87 = sphi 0, %s73
      %s91 = sphi 0, %s91
      %s93 = sphi 0, %s91
      %s94 = sphi 0, %s93
      %s108 = sphi 0, %s94
      %s112 = sphi 0, %s112
      %s114 = sphi 0, %s112
      %s115 = sphi 0, %s114
      %s129 = sphi 0, %s115
      %s133 = sphi 0, %s133
      %s135 = sphi 0, %s133
      %s136 = sphi 0, %s135
      %s150 = sphi 0, %s136
      %s154 = sphi 0, %s154
      %s156 = sphi 0, %s154
      %s157 = sphi 0, %s156
      %s171 = sphi 0, %s157
      %s175 = sphi 0, %s175
      %s177 = sphi 0, %s175
      %s178 = sphi 0, %s177
      %s192 = sphi 0, %s178
      %s196 = sphi 0, %s196
      %s198 = sphi 0, %s196
      %s199 = sphi 0, %s198
      %s213 = sphi 0, %s199
      %s221 = sphi 0, %s223
      %s224 = sphi 0, %s221
      %s225 = sphi 0, %s224
      %s241 = sphi 0, %s225
    $region4: #{tpu_custom_call.1} parent=1 // loop_header_branch
      %25 = sbr.rel (%p23) target = $region8
    $region5: #{tpu_custom_call.1} parent=1 // loop_body
      %s27 = ssub.s32 %s22, 1
      %s28 = ssub.s32 %s22, 2
      %s35 = sadd.s32 1, %s30
      %p36 = scmp.ge.s32.totalorder %s35, 2
      %s37 = scalar_select %p36, 0, %s35
      %s38 = sadd.s32 1, %s29
      %s39 = scalar_select %p36, %s38, %s29
      %p40 = scmp.ge.s32.totalorder %s39, 2
      %s41 = scalar_select %p40, 0, %s39
      %s42 = ssub.s32 %s29, %s41
      %s43 = ssub.s32 %s30, %s37
      %s44 = sor.u32 %s42, %s43
      %p45 = scmp.eq.s32.totalorder %s44, 0
      %s47 = sadd.s32 %s46, 1
      %s48 = scalar_select %p45, %s46, %s47
      %p51 = pneg %p45
      %p52 = scmp.eq.s32.totalorder %s22, 3
      %p53 = por %p51, %p52
      %p54 = scmp.ne.s32.totalorder %s46, %s49
      %p55 = scmp.eq.s32.totalorder %s22, 0
      %p56 = por %p54, %p55
      %p57 = scmp.ne.s32.totalorder %s46, %s49
      %p58 = scmp.eq.s32.totalorder %s27, 3
      %p59 = por %p57, %p58
      %p60 = scmp.ne.s32.totalorder %s49, %s50
      %p61 = scmp.eq.s32.totalorder %s27, 0
      %p62 = por %p60, %p61
      %p63 = scmp.ne.s32.totalorder %s49, %s50
      %p64 = scmp.eq.s32.totalorder %s28, 3
      %p65 = por %p63, %p64
      %p67 = scmp.ne.s32.totalorder %s50, %s66
      %p68 = scmp.eq.s32.totalorder %s28, 0
      %p69 = por %p67, %p68
      %s71 = sadd.s32 %s70, 1
      %p74 = scmp.eq.s32.totalorder %s22, 3
      %p75 = scmp.ne.s32.totalorder %s70, %s72
      %p76 = scmp.eq.s32.totalorder %s22, 0
      %p77 = por %p75, %p76
      %p78 = scmp.ne.s32.totalorder %s70, %s72
      %p79 = scmp.eq.s32.totalorder %s27, 3
      %p80 = por %p78, %p79
      %p81 = scmp.ne.s32.totalorder %s72, %s73
      %p82 = scmp.eq.s32.totalorder %s27, 0
      %p83 = por %p81, %p82
      %p84 = scmp.ne.s32.totalorder %s72, %s73
      %p85 = scmp.eq.s32.totalorder %s28, 3
      %p86 = por %p84, %p85
      %p88 = scmp.ne.s32.totalorder %s73, %s87
      %p89 = scmp.eq.s32.totalorder %s28, 0
      %p90 = por %p88, %p89
      %s92 = sadd.s32 %s91, 1
      %p95 = scmp.eq.s32.totalorder %s22, 3
      %p96 = scmp.ne.s32.totalorder %s91, %s93
      %p97 = scmp.eq.s32.totalorder %s22, 0
      %p98 = por %p96, %p97
      %p99 = scmp.ne.s32.totalorder %s91, %s93
      %p100 = scmp.eq.s32.totalorder %s27, 3
      %p101 = por %p99, %p100
      %p102 = scmp.ne.s32.totalorder %s93, %s94
      %p103 = scmp.eq.s32.totalorder %s27, 0
      %p104 = por %p102, %p103
      %p105 = scmp.ne.s32.totalorder %s93, %s94
      %p106 = scmp.eq.s32.totalorder %s28, 3
      %p107 = por %p105, %p106
      %p109 = scmp.ne.s32.totalorder %s94, %s108
      %p110 = scmp.eq.s32.totalorder %s28, 0
      %p111 = por %p109, %p110
      %s113 = sadd.s32 %s112, 1
      %p116 = scmp.eq.s32.totalorder %s22, 3
      %p117 = scmp.ne.s32.totalorder %s112, %s114
      %p118 = scmp.eq.s32.totalorder %s22, 0
      %p119 = por %p117, %p118
      %p120 = scmp.ne.s32.totalorder %s112, %s114
      %p121 = scmp.eq.s32.totalorder %s27, 3
      %p122 = por %p120, %p121
      %p123 = scmp.ne.s32.totalorder %s114, %s115
      %p124 = scmp.eq.s32.totalorder %s27, 0
      %p125 = por %p123, %p124
      %p126 = scmp.ne.s32.totalorder %s114, %s115
      %p127 = scmp.eq.s32.totalorder %s28, 3
      %p128 = por %p126, %p127
      %p130 = scmp.ne.s32.totalorder %s115, %s129
      %p131 = scmp.eq.s32.totalorder %s28, 0
      %p132 = por %p130, %p131
      %s134 = sadd.s32 %s133, 1
      %p137 = scmp.eq.s32.totalorder %s22, 3
      %p138 = scmp.ne.s32.totalorder %s133, %s135
      %p139 = scmp.eq.s32.totalorder %s22, 0
      %p140 = por %p138, %p139
      %p141 = scmp.ne.s32.totalorder %s133, %s135
      %p142 = scmp.eq.s32.totalorder %s27, 3
      %p143 = por %p141, %p142
      %p144 = scmp.ne.s32.totalorder %s135, %s136
      %p145 = scmp.eq.s32.totalorder %s27, 0
      %p146 = por %p144, %p145
      %p147 = scmp.ne.s32.totalorder %s135, %s136
      %p148 = scmp.eq.s32.totalorder %s28, 3
      %p149 = por %p147, %p148
      %p151 = scmp.ne.s32.totalorder %s136, %s150
      %p152 = scmp.eq.s32.totalorder %s28, 0
      %p153 = por %p151, %p152
      %s155 = sadd.s32 %s154, 1
      %p158 = scmp.eq.s32.totalorder %s22, 3
      %p159 = scmp.ne.s32.totalorder %s154, %s156
      %p160 = scmp.eq.s32.totalorder %s22, 0
      %p161 = por %p159, %p160
      %p162 = scmp.ne.s32.totalorder %s154, %s156
      %p163 = scmp.eq.s32.totalorder %s27, 3
      %p164 = por %p162, %p163
      %p165 = scmp.ne.s32.totalorder %s156, %s157
      %p166 = scmp.eq.s32.totalorder %s27, 0
      %p167 = por %p165, %p166
      %p168 = scmp.ne.s32.totalorder %s156, %s157
      %p169 = scmp.eq.s32.totalorder %s28, 3
      %p170 = por %p168, %p169
      %p172 = scmp.ne.s32.totalorder %s157, %s171
      %p173 = scmp.eq.s32.totalorder %s28, 0
      %p174 = por %p172, %p173
      %s176 = sadd.s32 %s175, 1
      %p179 = scmp.eq.s32.totalorder %s22, 3
      %p180 = scmp.ne.s32.totalorder %s175, %s177
      %p181 = scmp.eq.s32.totalorder %s22, 0
      %p182 = por %p180, %p181
      %p183 = scmp.ne.s32.totalorder %s175, %s177
      %p184 = scmp.eq.s32.totalorder %s27, 3
      %p185 = por %p183, %p184
      %p186 = scmp.ne.s32.totalorder %s177, %s178
      %p187 = scmp.eq.s32.totalorder %s27, 0
      %p188 = por %p186, %p187
      %p189 = scmp.ne.s32.totalorder %s177, %s178
      %p190 = scmp.eq.s32.totalorder %s28, 3
      %p191 = por %p189, %p190
      %p193 = scmp.ne.s32.totalorder %s178, %s192
      %p194 = scmp.eq.s32.totalorder %s28, 0
      %p195 = por %p193, %p194
      %s197 = sadd.s32 %s196, 1
      %p200 = scmp.eq.s32.totalorder %s22, 3
      %p201 = scmp.ne.s32.totalorder %s196, %s198
      %p202 = scmp.eq.s32.totalorder %s22, 0
      %p203 = por %p201, %p202
      %p204 = scmp.ne.s32.totalorder %s196, %s198
      %p205 = scmp.eq.s32.totalorder %s27, 3
      %p206 = por %p204, %p205
      %p207 = scmp.ne.s32.totalorder %s198, %s199
      %p208 = scmp.eq.s32.totalorder %s27, 0
      %p209 = por %p207, %p208
      %p210 = scmp.ne.s32.totalorder %s198, %s199
      %p211 = scmp.eq.s32.totalorder %s28, 3
      %p212 = por %p210, %p211
      %p214 = scmp.ne.s32.totalorder %s199, %s213
      %p215 = scmp.eq.s32.totalorder %s28, 0
      %p216 = por %p214, %p215
      %s217 = ssub.s32 %s29, %s41
      %s218 = ssub.s32 %s30, %s37
      %s219 = sor.u32 %s217, %s218
      %p220 = scmp.eq.s32.totalorder %s219, 0
      %s222 = sadd.s32 %s221, 1
      %s223 = scalar_select %p220, %s221, %s222
      %p226 = pneg %p220
      %p227 = scmp.eq.s32.totalorder %s22, 3
      %p228 = por %p226, %p227
      %p229 = scmp.ne.s32.totalorder %s221, %s224
      %p230 = scmp.eq.s32.totalorder %s22, 0
      %p231 = por %p229, %p230
      %p232 = scmp.ne.s32.totalorder %s221, %s224
      %p233 = scmp.eq.s32.totalorder %s27, 3
      %p234 = por %p232, %p233
      %p235 = scmp.ne.s32.totalorder %s224, %s225
      %p236 = scmp.eq.s32.totalorder %s27, 0
      %p237 = por %p235, %p236
      %p238 = scmp.ne.s32.totalorder %s224, %s225
      %p239 = scmp.eq.s32.totalorder %s28, 3
      %p240 = por %p238, %p239
      %p242 = scmp.ne.s32.totalorder %s225, %s241
      %p243 = scmp.eq.s32.totalorder %s28, 0
      %p244 = por %p242, %p243
      %p245 = scmp.le.s32.totalorder 1, %s22
      %p246 = scmp.lt.s32.totalorder %s22, 5
      %p247 = pnand %p245, %p246
      %p248 = pneg %p247
      // Predicated region
      $region9: #{tpu_custom_call.1} parent=5 // pred_check
        _
      $region10: #{tpu_custom_call.1} parent=5 // pred_check_branch
        %250 = sbr.rel (%p247) target = $region12
      $region11: #{tpu_custom_call.1} parent=5 // pred_region
        %s251 = ssub.s32 %s22, 1
        // Predicated region
        $region13: #{tpu_custom_call.1} parent=11 // pred_check
          %p252 = pneg %p83
        $region14: #{tpu_custom_call.1} parent=11 // pred_check_branch
          %254 = sbr.rel (%p252) target = $region16
        $region15: #{tpu_custom_call.1} parent=11 // pred_region
          _
        $region16: #{tpu_custom_call.1} parent=11 // pred_fallthru
          _
        // Predicated region
        $region17: #{tpu_custom_call.1} parent=11 // pred_check
          %p255 = pneg %p104
        $region18: #{tpu_custom_call.1} parent=11 // pred_check_branch
          %257 = sbr.rel (%p255) target = $region20
        $region19: #{tpu_custom_call.1} parent=11 // pred_region
          _
        $region20: #{tpu_custom_call.1} parent=11 // pred_fallthru
          _
        // Predicated region
        $region21: #{tpu_custom_call.1} parent=11 // pred_check
          %p258 = pneg %p125
        $region22: #{tpu_custom_call.1} parent=11 // pred_check_branch
          %260 = sbr.rel (%p258) target = $region24
        $region23: #{tpu_custom_call.1} parent=11 // pred_region
          _
        $region24: #{tpu_custom_call.1} parent=11 // pred_fallthru
          _
        // Predicated region
        $region25: #{tpu_custom_call.1} parent=11 // pred_check
          %p261 = pneg %p146
        $region26: #{tpu_custom_call.1} parent=11 // pred_check_branch
          %263 = sbr.rel (%p261) target = $region28
        $region27: #{tpu_custom_call.1} parent=11 // pred_region
          %265 = vsyncadd [#allocation7], 0
          %s266 = sshll.u32 %s4, 4
          %s267 = int_to_ptr.hbm [resolvable:$true] %s266
          %s268 = sshll.u32 [#allocation6], 4
          %s269 = int_to_ptr.vmem [resolvable:$true] %s268
          %274 = dma.hbm_to_vmem [thread:$0]  %s267, 9216, %s269, [#allocation7], 64, 64, 4
        $region28: #{tpu_custom_call.1} parent=11 // pred_fallthru
          _
        // Predicated region
        $region29: #{tpu_custom_call.1} parent=11 // pred_check
          %p275 = pneg %p167
        $region30: #{tpu_custom_call.1} parent=11 // pred_check_branch
          %277 = sbr.rel (%p275) target = $region32
        $region31: #{tpu_custom_call.1} parent=11 // pred_region
          _
        $region32: #{tpu_custom_call.1} parent=11 // pred_fallthru
          _
        // Predicated region
        $region33: #{tpu_custom_call.1} parent=11 // pred_check
          %p278 = pneg %p188
        $region34: #{tpu_custom_call.1} parent=11 // pred_check_branch
          %280 = sbr.rel (%p278) target = $region36
        $region35: #{tpu_custom_call.1} parent=11 // pred_region
          _
        $region36: #{tpu_custom_call.1} parent=11 // pred_fallthru
          _
        // Predicated region
        $region37: #{tpu_custom_call.1} parent=11 // pred_check
          %p281 = pneg %p209
        $region38: #{tpu_custom_call.1} parent=11 // pred_check_branch
          %283 = sbr.rel (%p281) target = $region40
        $region39: #{tpu_custom_call.1} parent=11 // pred_region
          %285 = vsyncadd [#allocation5], 0
          %s287 = sshll.u32 %s7, 4
          %s288 = int_to_ptr.vmem [resolvable:$true] %s287
          %290 = dma.vmem_to_smem %s288, 16, [#allocation8], [#allocation5]
        $region40: #{tpu_custom_call.1} parent=11 // pred_fallthru
          _
      $region12: #{tpu_custom_call.1} parent=5 // pred_fallthru
        _
      %p291 = scmp.lt.s32.totalorder %s22, 4
      // Predicated region
      $region41: #{tpu_custom_call.1} parent=5 // pred_check
        %p292 = pneg %p291
      $region42: #{tpu_custom_call.1} parent=5 // pred_check_branch
        %294 = sbr.rel (%p292) target = $region44
      $region43: #{tpu_custom_call.1} parent=5 // pred_region
        // Predicated region
        $region45: #{tpu_custom_call.1} parent=43 // pred_check
          %p295 = pneg %p56
        $region46: #{tpu_custom_call.1} parent=43 // pred_check_branch
          %297 = sbr.rel (%p295) target = $region48
        $region47: #{tpu_custom_call.1} parent=43 // pred_region
          %s298 = sand.u32 %s46, 1
          %s299 = scalar_lea.sflag [#allocation3], %s298
          %s300 = sand.u32 %s46, 1
          %s301 = smul.addr %s300, 24
          %s302 = scalar_lea.vmem [#allocation2], %s301
          %s303 = smul.u32 6, %s30
          %s304 = ssub.s32 7, %s303
          %p305 = scmp.lt.s32.totalorder %s304, 6
          %s306 = scalar_select %p305, %s304, 6
          %s307 = smul.u32 4, %s306
          %s308 = ssub.s32 24, %s307
          %s309 = sshll.u32 %s308, 4
          %310 = vsyncadd %s299, %s309
          %p311 = scmp.ne.s32.totalorder 0, %s307
          %s312 = smul.addr %s29, 7
          %s313 = sadd.s32 %s303, %s312
          %s314 = smul.addr %s313, 4
          %s315 = scalar_lea.hbm %s0, %s314
          %s316 = smul.u32 %s306, 4
          %s317 = sshll.u32 %s316, 4
          %s318 = sshll.u32 %s315, 4
          %s319 = int_to_ptr.hbm [resolvable:$true] %s318
          %s320 = sshll.u32 %s302, 4
          %s321 = int_to_ptr.vmem [resolvable:$true] %s320
          %323 = dma.hbm_to_vmem [thread:$0]  (%p311), %s319, %s317, %s321, %s299
        $region48: #{tpu_custom_call.1} parent=43 // pred_fallthru
          _
      $region44: #{tpu_custom_call.1} parent=5 // pred_fallthru
        _
      %p324 = scmp.le.s32.totalorder 1, %s22
      %p325 = scmp.lt.s32.totalorder %s22, 5
      %p326 = pnand %p324, %p325
      %p327 = pneg %p326
      // Predicated region
      $region49: #{tpu_custom_call.1} parent=5 // pred_check
        _
      $region50: #{tpu_custom_call.1} parent=5 // pred_check_branch
        %329 = sbr.rel (%p326) target = $region52
      $region51: #{tpu_custom_call.1} parent=5 // pred_region
        %s330 = ssub.s32 %s22, 1
        %s331 = sand.u32 %s49, 1
        %s332 = scalar_lea.sflag [#allocation3], %s331
        %s333 = sand.u32 %s49, 1
        %s334 = smul.addr %s333, 24
        %s335 = scalar_lea.vmem [#allocation2], %s334
        // Predicated region
        $region53: #{tpu_custom_call.1} parent=51 // pred_check
          %p336 = pneg %p62
        $region54: #{tpu_custom_call.1} parent=51 // pred_check_branch
          %338 = sbr.rel (%p336) target = $region56
        $region55: #{tpu_custom_call.1} parent=51 // pred_region
          %340 = dma.done %s332, 384
        $region56: #{tpu_custom_call.1} parent=51 // pred_fallthru
          _
        // Predicated region
        $region57: #{tpu_custom_call.1} parent=51 // pred_check
          %p341 = pneg %p146
        $region58: #{tpu_custom_call.1} parent=51 // pred_check_branch
          %343 = sbr.rel (%p341) target = $region60
        $region59: #{tpu_custom_call.1} parent=51 // pred_region
          %345 = dma.done [#allocation7], 9216
        $region60: #{tpu_custom_call.1} parent=51 // pred_fallthru
          _
        // Predicated region
        $region61: #{tpu_custom_call.1} parent=51 // pred_check
          %p346 = pneg %p209
        $region62: #{tpu_custom_call.1} parent=51 // pred_check_branch
          %348 = sbr.rel (%p346) target = $region64
        $region63: #{tpu_custom_call.1} parent=51 // pred_region
          %350 = dma.done [#allocation5], 16
        $region64: #{tpu_custom_call.1} parent=51 // pred_fallthru
          _
        %351 = sfence
        %s352 = sand.u32 %s49, 1
        %s353 = scalar_lea.sflag [#allocation3], %s352
        %s354 = sand.u32 %s49, 1
        %s355 = smul.addr %s354, 24
        %s356 = scalar_lea.vmem [#allocation2], %s355
        %p357 = pneg %p62
        %p358 = pneg %p59
        %p359 = pneg %p83
        %p360 = pneg %p80
        %p361 = pneg %p104
        %p362 = pneg %p101
        %p363 = pneg %p125
        %p364 = pneg %p122
        %p365 = pneg %p146
        %p366 = pneg %p143
        %p367 = pneg %p167
        %p368 = pneg %p164
        %p369 = pneg %p188
        %p370 = pneg %p185
        %p371 = pneg %p209
        %p372 = pneg %p206
        %p373 = pneg %p237
        %p374 = pneg %p234
        %s375 = sand.u32 %s224, 1
        %s376 = scalar_lea.sflag [#allocation4], %s375
        %s377 = sand.u32 %s224, 1
        %s378 = smul.addr %s377, 16
        %s379 = scalar_lea.vmem [#allocation9], %s378
        %s380 = smul.u32 6, %s32
        %s381 = ssub.s32 7, %s380
        %p382 = scmp.lt.s32.totalorder %s381, 6
        %s383 = scalar_select %p382, %s381, 6
        %s384 = smul.u32 4, %s383
        %s385 = smul.u32 2, %s32
        %s386 = ssub.s32 3, %s385
        %p387 = scmp.lt.s32.totalorder %s386, 2
        %s388 = scalar_select %p387, %s386, 2
        %s389 = smul.u32 8, %s388
        %v391 = vld [vmem:[%s335] sm:$0xff]
        %v392 = vld [vmem:[%s335 + $0x8] sm:$0xff]
        %v393 = vld [vmem:[%s335 + $0x10] sm:$0xff]
        %s394 = smul.u32 %s32, 256
        %s395 = ssub.s32 259, %s394
        %s396 = smul.u32 %s395, 3
        %v397 = vlaneseq
        %v398 = vand.u32 %v397, 127
        %v399 = vadd.s32 %v398, 128
        %v400 = vadd.s32 %v398, 256
        %v401 = vadd.s32 %v398, 384
        %v402 = vadd.s32 %v398, 512
        %v403 = vadd.s32 %v398, 640
        %v404 = vstv %s396
        %vm405 = vcmp.lt.s32.totalorder %v398, %v404
        %vm406 = vcmp.lt.s32.totalorder %v399, %v404
        %vm407 = vcmp.lt.s32.totalorder %v400, %v404
        %vm408 = vcmp.lt.s32.totalorder %v401, %v404
        %vm409 = vcmp.lt.s32.totalorder %v402, %v404
        %vm410 = vcmp.lt.s32.totalorder %v403, %v404
        %414 = vst [vmem:[#allocation1] ss:$2 sm:$0xff] %v391
        %s415 = scalar_lea.vmem [#allocation1], 16
        %416 = vst [vmem:[%s415] ss:$2 sm:$0xff] %v392
        %s417 = scalar_lea.vmem [#allocation1], 32
        %418 = vst [vmem:[%s417] ss:$2 sm:$0xff] %v393
        %v419 = vld.sshfl [vmem:[#allocation1] sm:$0xff pattern:$0x75316420]
        %v420 = vld.sshfl [vmem:[#allocation1 + $0x8] sm:$0xff pattern:$0x75316420]
        %v421 = vld.sshfl [vmem:[#allocation1 + $0x10] sm:$0xff pattern:$0x75316420]
        %v422 = vld.sshfl [vmem:[#allocation1 + $0x18] sm:$0xff pattern:$0x75316420]
        %v423 = vld.sshfl [vmem:[#allocation1 + $0x20] sm:$0xff pattern:$0x75316420]
        %v424 = vld.sshfl [vmem:[#allocation1 + $0x28] sm:$0xff pattern:$0x75316420]
        %v431 = vsel %vm405, %v419, 0.0
        %v432 = vsel %vm406, %v420, 0.0
        %v433 = vsel %vm407, %v421, 0.0
        %v434 = vsel %vm408, %v422, 0.0
        %v435 = vsel %vm409, %v423, 0.0
        %v436 = vsel %vm410, %v424, 0.0
        %v437 = vpack.c.bf16 %v431, %v431
        %v438 = vpack.c.bf16 %v432, %v432
        %v439 = vpack.c.bf16 %v433, %v433
        %v440 = vpack.c.bf16 %v434, %v434
        %v441 = vpack.c.bf16 %v435, %v435
        %v442 = vpack.c.bf16 %v436, %v436
        %s443 = sld [smem:[#allocation8]]
        %s444 = sld [smem:[#allocation8 + $0x1]]
        %v445 = vld [vmem:[%s5] sm:$0xff]
        %v446 = vld [vmem:[%s6] sm:$0xff]
        %v447 = vld [vmem:[%s1] sm:$0xf]
        %449 = vset.pattern.permute.xlu0 0
        %450 = vperm.xlu0 %449, %v445
        %v451 = vpop.permute.xlu0 %450
        %vm453 = vcmask 31744
        %v455 = vsel %vm453, %v447, 0
        %vm457 = vcmask 1041408
        %v459 = vsel %vm457, %v437, 0
        %v462 = vsel %vm457, %v438, 0
        %v465 = vsel %vm457, %v439, 0
        %v468 = vsel %vm457, %v440, 0
        %v471 = vsel %vm457, %v441, 0
        %v474 = vsel %vm457, %v442, 0
        %476 = vmatpush.bf16.msra.mxu0 0
        %477 = vmatpush.bf16.msra.mxu0 0
        %478 = vmatpush.bf16.msra.mxu0 0
        %479 = vmatpush.bf16.msra.mxu0 0
        %480 = vmatpush.bf16.msra.mxu0 0
        %481 = vmatpush.bf16.msra.mxu0 0
        %482 = vmatpush.bf16.msra.mxu0 0
        %483 = vmatpush.bf16.msra.mxu0 %v459
        %484 = vmatmul.bf16.gmra.mxu0 %v455
        %v485 = vpop.f32.mrf.mxu0
        %v486 = vadd.f32 %v451, %v485
        %v487 = vpop.f32.mrf.mxu0
        %488 = vdwg.mxu0
        %489 = vmatpush.bf16.msra.mxu0 0
        %490 = vmatpush.bf16.msra.mxu0 0
        %491 = vmatpush.bf16.msra.mxu0 0
        %492 = vmatpush.bf16.msra.mxu0 0
        %493 = vmatpush.bf16.msra.mxu0 0
        %494 = vmatpush.bf16.msra.mxu0 0
        %495 = vmatpush.bf16.msra.mxu0 0
        %496 = vmatpush.bf16.msra.mxu0 %v462
        %497 = vmatmul.bf16.gmra.mxu0 %v455
        %v498 = vpop.f32.mrf.mxu0
        %v499 = vadd.f32 %v451, %v498
        %v500 = vpop.f32.mrf.mxu0
        %501 = vdwg.mxu0
        %502 = vmatpush.bf16.msra.mxu0 0
        %503 = vmatpush.bf16.msra.mxu0 0
        %504 = vmatpush.bf16.msra.mxu0 0
        %505 = vmatpush.bf16.msra.mxu0 0
        %506 = vmatpush.bf16.msra.mxu0 0
        %507 = vmatpush.bf16.msra.mxu0 0
        %508 = vmatpush.bf16.msra.mxu0 0
        %509 = vmatpush.bf16.msra.mxu0 %v465
        %510 = vmatmul.bf16.gmra.mxu0 %v455
        %v511 = vpop.f32.mrf.mxu0
        %v512 = vadd.f32 %v451, %v511
        %v513 = vpop.f32.mrf.mxu0
        %514 = vdwg.mxu0
        %515 = vmatpush.bf16.msra.mxu0 0
        %516 = vmatpush.bf16.msra.mxu0 0
        %517 = vmatpush.bf16.msra.mxu0 0
        %518 = vmatpush.bf16.msra.mxu0 0
        %519 = vmatpush.bf16.msra.mxu0 0
        %520 = vmatpush.bf16.msra.mxu0 0
        %521 = vmatpush.bf16.msra.mxu0 0
        %522 = vmatpush.bf16.msra.mxu0 %v468
        %523 = vmatmul.bf16.gmra.mxu0 %v455
        %v524 = vpop.f32.mrf.mxu0
        %v525 = vadd.f32 %v451, %v524
        %v526 = vpop.f32.mrf.mxu0
        %527 = vdwg.mxu0
        %528 = vmatpush.bf16.msra.mxu0 0
        %529 = vmatpush.bf16.msra.mxu0 0
        %530 = vmatpush.bf16.msra.mxu0 0
        %531 = vmatpush.bf16.msra.mxu0 0
        %532 = vmatpush.bf16.msra.mxu0 0
        %533 = vmatpush.bf16.msra.mxu0 0
        %534 = vmatpush.bf16.msra.mxu0 0
        %535 = vmatpush.bf16.msra.mxu0 %v471
        %536 = vmatmul.bf16.gmra.mxu0 %v455
        %v537 = vpop.f32.mrf.mxu0
        %v538 = vadd.f32 %v451, %v537
        %v539 = vpop.f32.mrf.mxu0
        %540 = vdwg.mxu0
        %541 = vmatpush.bf16.msra.mxu0 0
        %542 = vmatpush.bf16.msra.mxu0 0
        %543 = vmatpush.bf16.msra.mxu0 0
        %544 = vmatpush.bf16.msra.mxu0 0
        %545 = vmatpush.bf16.msra.mxu0 0
        %546 = vmatpush.bf16.msra.mxu0 0
        %547 = vmatpush.bf16.msra.mxu0 0
        %548 = vmatpush.bf16.msra.mxu0 %v474
        %549 = vmatmul.bf16.gmra.mxu0 %v455
        %v550 = vpop.f32.mrf.mxu0
        %v551 = vadd.f32 %v451, %v550
        %v552 = vpop.f32.mrf.mxu0
        %553 = vdwg.mxu0
        %vm554 = vcmp.ge.f32.partialorder %v486, 0.0
        %vm555 = vcmp.ge.f32.partialorder %v499, 0.0
        %vm556 = vcmp.ge.f32.partialorder %v512, 0.0
        %vm557 = vcmp.ge.f32.partialorder %v525, 0.0
        %vm558 = vcmp.ge.f32.partialorder %v538, 0.0
        %vm559 = vcmp.ge.f32.partialorder %v551, 0.0
        %v560 = vstv %s443
        %v561 = vmul.f32 %v560, %v486
        %v562 = vmul.f32 %v560, %v499
        %v563 = vmul.f32 %v560, %v512
        %v564 = vmul.f32 %v560, %v525
        %v565 = vmul.f32 %v560, %v538
        %v566 = vmul.f32 %v560, %v551
        %v567 = vsel %vm554, %v486, %v561
        %v568 = vsel %vm555, %v499, %v562
        %v569 = vsel %vm556, %v512, %v563
        %v570 = vsel %vm557, %v525, %v564
        %v571 = vsel %vm558, %v538, %v565
        %v572 = vsel %vm559, %v551, %v566
        %v573 = vld [vmem:[%s2] sm:$0xf]
        %v574 = vpack.c.bf16 %v567, %v567
        %v575 = vpack.c.bf16 %v568, %v568
        %v576 = vpack.c.bf16 %v569, %v569
        %v577 = vpack.c.bf16 %v570, %v570
        %v578 = vpack.c.bf16 %v571, %v571
        %v579 = vpack.c.bf16 %v572, %v572
        %v580 = vld [vmem:[%s3] sm:$0xf]
        %v582 = vsel %vm453, %v580, 0
        %584 = vmatpush.bf16.msra.mxu0 0
        %585 = vmatpush.bf16.msra.mxu0 0
        %586 = vmatpush.bf16.msra.mxu0 0
        %587 = vmatpush.bf16.msra.mxu0 0
        %588 = vmatpush.bf16.msra.mxu0 0
        %589 = vmatpush.bf16.msra.mxu0 0
        %590 = vmatpush.bf16.msra.mxu0 0
        %591 = vmatpush.bf16.msra.mxu0 %v459
        %592 = vmatmul.bf16.gmra.mxu0 %v582
        %v593 = vpop.f32.mrf.mxu0
        %v594 = vadd.f32 0.0, %v593
        %v595 = vpop.f32.mrf.mxu0
        %596 = vdwg.mxu0
        %597 = vmatpush.bf16.msra.mxu0 0
        %598 = vmatpush.bf16.msra.mxu0 0
        %599 = vmatpush.bf16.msra.mxu0 0
        %600 = vmatpush.bf16.msra.mxu0 0
        %601 = vmatpush.bf16.msra.mxu0 0
        %602 = vmatpush.bf16.msra.mxu0 0
        %603 = vmatpush.bf16.msra.mxu0 0
        %604 = vmatpush.bf16.msra.mxu0 %v462
        %605 = vmatmul.bf16.gmra.mxu0 %v582
        %v606 = vpop.f32.mrf.mxu0
        %v607 = vadd.f32 0.0, %v606
        %v608 = vpop.f32.mrf.mxu0
        %609 = vdwg.mxu0
        %610 = vmatpush.bf16.msra.mxu0 0
        %611 = vmatpush.bf16.msra.mxu0 0
        %612 = vmatpush.bf16.msra.mxu0 0
        %613 = vmatpush.bf16.msra.mxu0 0
        %614 = vmatpush.bf16.msra.mxu0 0
        %615 = vmatpush.bf16.msra.mxu0 0
        %616 = vmatpush.bf16.msra.mxu0 0
        %617 = vmatpush.bf16.msra.mxu0 %v465
        %618 = vmatmul.bf16.gmra.mxu0 %v582
        %v619 = vpop.f32.mrf.mxu0
        %v620 = vadd.f32 0.0, %v619
        %v621 = vpop.f32.mrf.mxu0
        %622 = vdwg.mxu0
        %623 = vmatpush.bf16.msra.mxu0 0
        %624 = vmatpush.bf16.msra.mxu0 0
        %625 = vmatpush.bf16.msra.mxu0 0
        %626 = vmatpush.bf16.msra.mxu0 0
        %627 = vmatpush.bf16.msra.mxu0 0
        %628 = vmatpush.bf16.msra.mxu0 0
        %629 = vmatpush.bf16.msra.mxu0 0
        %630 = vmatpush.bf16.msra.mxu0 %v468
        %631 = vmatmul.bf16.gmra.mxu0 %v582
        %v632 = vpop.f32.mrf.mxu0
        %v633 = vadd.f32 0.0, %v632
        %v634 = vpop.f32.mrf.mxu0
        %635 = vdwg.mxu0
        %636 = vmatpush.bf16.msra.mxu0 0
        %637 = vmatpush.bf16.msra.mxu0 0
        %638 = vmatpush.bf16.msra.mxu0 0
        %639 = vmatpush.bf16.msra.mxu0 0
        %640 = vmatpush.bf16.msra.mxu0 0
        %641 = vmatpush.bf16.msra.mxu0 0
        %642 = vmatpush.bf16.msra.mxu0 0
        %643 = vmatpush.bf16.msra.mxu0 %v471
        %644 = vmatmul.bf16.gmra.mxu0 %v582
        %v645 = vpop.f32.mrf.mxu0
        %v646 = vadd.f32 0.0, %v645
        %v647 = vpop.f32.mrf.mxu0
        %648 = vdwg.mxu0
        %649 = vmatpush.bf16.msra.mxu0 0
        %650 = vmatpush.bf16.msra.mxu0 0
        %651 = vmatpush.bf16.msra.mxu0 0
        %652 = vmatpush.bf16.msra.mxu0 0
        %653 = vmatpush.bf16.msra.mxu0 0
        %654 = vmatpush.bf16.msra.mxu0 0
        %655 = vmatpush.bf16.msra.mxu0 0
        %656 = vmatpush.bf16.msra.mxu0 %v474
        %657 = vmatmul.bf16.gmra.mxu0 %v582
        %v658 = vpop.f32.mrf.mxu0
        %v659 = vadd.f32 0.0, %v658
        %v660 = vpop.f32.mrf.mxu0
        %661 = vdwg.mxu0
        %vm662 = vcmask 64512
        %v664 = vsel %vm662, %v573, 0
        %vm666 = vcmask 1043456
        %v668 = vsel %vm666, %v574, 0
        %v671 = vsel %vm666, %v575, 0
        %v674 = vsel %vm666, %v576, 0
        %v677 = vsel %vm666, %v577, 0
        %v680 = vsel %vm666, %v578, 0
        %v683 = vsel %vm666, %v579, 0
        %685 = vmatpush.bf16.msra.mxu0 0
        %686 = vmatpush.bf16.msra.mxu0 0
        %687 = vmatpush.bf16.msra.mxu0 0
        %688 = vmatpush.bf16.msra.mxu0 0
        %689 = vmatpush.bf16.msra.mxu0 0
        %690 = vmatpush.bf16.msra.mxu0 0
        %691 = vmatpush.bf16.msra.mxu0 0
        %692 = vmatpush.bf16.msra.mxu0 %v668
        %693 = vmatmul.bf16.gmra.mxu0 %v664
        %v694 = vpop.f32.mrf.mxu0
        %v695 = vadd.f32 %v594, %v694
        %v696 = vpop.f32.mrf.mxu0
        %697 = vdwg.mxu0
        %698 = vmatpush.bf16.msra.mxu0 0
        %699 = vmatpush.bf16.msra.mxu0 0
        %700 = vmatpush.bf16.msra.mxu0 0
        %701 = vmatpush.bf16.msra.mxu0 0
        %702 = vmatpush.bf16.msra.mxu0 0
        %703 = vmatpush.bf16.msra.mxu0 0
        %704 = vmatpush.bf16.msra.mxu0 0
        %705 = vmatpush.bf16.msra.mxu0 %v671
        %706 = vmatmul.bf16.gmra.mxu0 %v664
        %v707 = vpop.f32.mrf.mxu0
        %v708 = vadd.f32 %v607, %v707
        %v709 = vpop.f32.mrf.mxu0
        %710 = vdwg.mxu0
        %711 = vmatpush.bf16.msra.mxu0 0
        %712 = vmatpush.bf16.msra.mxu0 0
        %713 = vmatpush.bf16.msra.mxu0 0
        %714 = vmatpush.bf16.msra.mxu0 0
        %715 = vmatpush.bf16.msra.mxu0 0
        %716 = vmatpush.bf16.msra.mxu0 0
        %717 = vmatpush.bf16.msra.mxu0 0
        %718 = vmatpush.bf16.msra.mxu0 %v674
        %719 = vmatmul.bf16.gmra.mxu0 %v664
        %v720 = vpop.f32.mrf.mxu0
        %v721 = vadd.f32 %v620, %v720
        %v722 = vpop.f32.mrf.mxu0
        %723 = vdwg.mxu0
        %724 = vmatpush.bf16.msra.mxu0 0
        %725 = vmatpush.bf16.msra.mxu0 0
        %726 = vmatpush.bf16.msra.mxu0 0
        %727 = vmatpush.bf16.msra.mxu0 0
        %728 = vmatpush.bf16.msra.mxu0 0
        %729 = vmatpush.bf16.msra.mxu0 0
        %730 = vmatpush.bf16.msra.mxu0 0
        %731 = vmatpush.bf16.msra.mxu0 %v677
        %732 = vmatmul.bf16.gmra.mxu0 %v664
        %v733 = vpop.f32.mrf.mxu0
        %v734 = vadd.f32 %v633, %v733
        %v735 = vpop.f32.mrf.mxu0
        %736 = vdwg.mxu0
        %737 = vmatpush.bf16.msra.mxu0 0
        %738 = vmatpush.bf16.msra.mxu0 0
        %739 = vmatpush.bf16.msra.mxu0 0
        %740 = vmatpush.bf16.msra.mxu0 0
        %741 = vmatpush.bf16.msra.mxu0 0
        %742 = vmatpush.bf16.msra.mxu0 0
        %743 = vmatpush.bf16.msra.mxu0 0
        %744 = vmatpush.bf16.msra.mxu0 %v680
        %745 = vmatmul.bf16.gmra.mxu0 %v664
        %v746 = vpop.f32.mrf.mxu0
        %v747 = vadd.f32 %v646, %v746
        %v748 = vpop.f32.mrf.mxu0
        %749 = vdwg.mxu0
        %750 = vmatpush.bf16.msra.mxu0 0
        %751 = vmatpush.bf16.msra.mxu0 0
        %752 = vmatpush.bf16.msra.mxu0 0
        %753 = vmatpush.bf16.msra.mxu0 0
        %754 = vmatpush.bf16.msra.mxu0 0
        %755 = vmatpush.bf16.msra.mxu0 0
        %756 = vmatpush.bf16.msra.mxu0 0
        %757 = vmatpush.bf16.msra.mxu0 %v683
        %758 = vmatmul.bf16.gmra.mxu0 %v664
        %v759 = vpop.f32.mrf.mxu0
        %v760 = vadd.f32 %v659, %v759
        %v761 = vpop.f32.mrf.mxu0
        %762 = vdwg.mxu0
        %764 = vset.pattern.permute.xlu0 0
        %765 = vperm.xlu0 %764, %v446
        %v766 = vpop.permute.xlu0 %765
        %v768 = vadd.f32 %v695, %v766
        %v769 = vadd.f32 %v708, %v766
        %v770 = vadd.f32 %v721, %v766
        %v771 = vadd.f32 %v734, %v766
        %v772 = vadd.f32 %v747, %v766
        %v773 = vadd.f32 %v760, %v766
        %vm774 = vcmp.ge.f32.partialorder %v768, 0.0
        %vm775 = vcmp.ge.f32.partialorder %v769, 0.0
        %vm776 = vcmp.ge.f32.partialorder %v770, 0.0
        %vm777 = vcmp.ge.f32.partialorder %v771, 0.0
        %vm778 = vcmp.ge.f32.partialorder %v772, 0.0
        %vm779 = vcmp.ge.f32.partialorder %v773, 0.0
        %v780 = vstv %s444
        %v781 = vmul.f32 %v780, %v768
        %v782 = vmul.f32 %v780, %v769
        %v783 = vmul.f32 %v780, %v770
        %v784 = vmul.f32 %v780, %v771
        %v785 = vmul.f32 %v780, %v772
        %v786 = vmul.f32 %v780, %v773
        %v787 = vsel %vm774, %v768, %v781
        %v788 = vsel %vm775, %v769, %v782
        %v789 = vsel %vm776, %v770, %v783
        %v790 = vsel %vm777, %v771, %v784
        %v791 = vsel %vm778, %v772, %v785
        %v792 = vsel %vm779, %v773, %v786
        %793 = vrot.lane.b32.xlu0 %v787, 127
        %v794 = vpop.permute.xlu0 %793
        %795 = vrot.lane.b32.xlu0 %v788, 127
        %v796 = vpop.permute.xlu0 %795
        %797 = vrot.lane.b32.xlu0 %v789, 127
        %v798 = vpop.permute.xlu0 %797
        %799 = vrot.lane.b32.xlu0 %v790, 127
        %v800 = vpop.permute.xlu0 %799
        %801 = vrot.lane.b32.xlu0 %v791, 127
        %v802 = vpop.permute.xlu0 %801
        %803 = vrot.lane.b32.xlu0 %v792, 127
        %v804 = vpop.permute.xlu0 %803
        %vm805 = vcmp.lt.s32.totalorder %v398, 127
        %v806 = vsel %vm805, %v802, %v804
        %v807 = vsel %vm805, %v800, %v802
        %v808 = vsel %vm805, %v798, %v800
        %v809 = vsel %vm805, %v796, %v798
        %v810 = vsel %vm805, %v794, %v796
        %v811 = vsel %vm805, %v804, %v794
        %v812 = vmax.f32 %v787, %v810
        %v813 = vmax.f32 %v788, %v809
        %v814 = vmax.f32 %v789, %v808
        %v815 = vmax.f32 %v790, %v807
        %v816 = vmax.f32 %v791, %v806
        %v817 = vmax.f32 %v792, %v811
        %818 = vrot.lane.b32.xlu0 %v787, 126
        %v819 = vpop.permute.xlu0 %818
        %820 = vrot.lane.b32.xlu0 %v788, 126
        %v821 = vpop.permute.xlu0 %820
        %822 = vrot.lane.b32.xlu0 %v789, 126
        %v823 = vpop.permute.xlu0 %822
        %824 = vrot.lane.b32.xlu0 %v790, 126
        %v825 = vpop.permute.xlu0 %824
        %826 = vrot.lane.b32.xlu0 %v791, 126
        %v827 = vpop.permute.xlu0 %826
        %828 = vrot.lane.b32.xlu0 %v792, 126
        %v829 = vpop.permute.xlu0 %828
        %vm830 = vcmp.lt.s32.totalorder %v398, 126
        %v831 = vsel %vm830, %v827, %v829
        %v832 = vsel %vm830, %v825, %v827
        %v833 = vsel %vm830, %v823, %v825
        %v834 = vsel %vm830, %v821, %v823
        %v835 = vsel %vm830, %v819, %v821
        %v836 = vsel %vm830, %v829, %v819
        %v837 = vmax.f32 %v812, %v835
        %v838 = vmax.f32 %v813, %v834
        %v839 = vmax.f32 %v814, %v833
        %v840 = vmax.f32 %v815, %v832
        %v841 = vmax.f32 %v816, %v831
        %v842 = vmax.f32 %v817, %v836
        %v843 = vpack.c.bf16 %v838, %v837
        %v844 = vpack.c.bf16 %v840, %v839
        %v845 = vpack.c.bf16 %v842, %v841
        %v846 = vld [vmem:[#allocation6] sm:$0xf]
        %v847 = vld [vmem:[#allocation6 + $0x4] sm:$0xf]
        %v848 = vld [vmem:[#allocation6 + $0x8] sm:$0xf]
        %v849 = vld [vmem:[#allocation6 + $0xc] sm:$0xf]
        %v850 = vld [vmem:[#allocation6 + $0x10] sm:$0xf]
        %v851 = vld [vmem:[#allocation6 + $0x14] sm:$0xf]
        %v852 = vld [vmem:[#allocation6 + $0x18] sm:$0xf]
        %v853 = vld [vmem:[#allocation6 + $0x1c] sm:$0xf]
        %v854 = vld [vmem:[#allocation6 + $0x20] sm:$0xf]
        %v855 = vld [vmem:[#allocation6 + $0x24] sm:$0xf]
        %v856 = vld [vmem:[#allocation6 + $0x28] sm:$0xf]
        %v857 = vld [vmem:[#allocation6 + $0x2c] sm:$0xf]
        %v858 = vld [vmem:[#allocation6 + $0x30] sm:$0xf]
        %v859 = vld [vmem:[#allocation6 + $0x34] sm:$0xf]
        %v860 = vld [vmem:[#allocation6 + $0x38] sm:$0xf]
        %v861 = vld [vmem:[#allocation6 + $0x3c] sm:$0xf]
        %v862 = vld [vmem:[#allocation6 + $0x40] sm:$0xf]
        %v863 = vld [vmem:[#allocation6 + $0x44] sm:$0xf]
        %v864 = vld [vmem:[#allocation6 + $0x48] sm:$0xf]
        %v865 = vld [vmem:[#allocation6 + $0x4c] sm:$0xf]
        %v866 = vld [vmem:[#allocation6 + $0x50] sm:$0xf]
        %v867 = vld [vmem:[#allocation6 + $0x54] sm:$0xf]
        %v868 = vld [vmem:[#allocation6 + $0x58] sm:$0xf]
        %v869 = vld [vmem:[#allocation6 + $0x5c] sm:$0xf]
        %v870 = vld [vmem:[#allocation6 + $0x60] sm:$0xf]
        %v871 = vld [vmem:[#allocation6 + $0x64] sm:$0xf]
        %v872 = vld [vmem:[#allocation6 + $0x68] sm:$0xf]
        %v873 = vld [vmem:[#allocation6 + $0x6c] sm:$0xf]
        %v874 = vld [vmem:[#allocation6 + $0x70] sm:$0xf]
        %v875 = vld [vmem:[#allocation6 + $0x74] sm:$0xf]
        %v876 = vld [vmem:[#allocation6 + $0x78] sm:$0xf]
        %v877 = vld [vmem:[#allocation6 + $0x7c] sm:$0xf]
        %v878 = vld [vmem:[#allocation6 + $0x80] sm:$0xf]
        %v879 = vld [vmem:[#allocation6 + $0x84] sm:$0xf]
        %v880 = vld [vmem:[#allocation6 + $0x88] sm:$0xf]
        %v881 = vld [vmem:[#allocation6 + $0x8c] sm:$0xf]
        %v882 = vld [vmem:[#allocation6 + $0x90] sm:$0xf]
        %v883 = vld [vmem:[#allocation6 + $0x94] sm:$0xf]
        %v884 = vld [vmem:[#allocation6 + $0x98] sm:$0xf]
        %v885 = vld [vmem:[#allocation6 + $0x9c] sm:$0xf]
        %v886 = vld [vmem:[#allocation6 + $0xa0] sm:$0xf]
        %v887 = vld [vmem:[#allocation6 + $0xa4] sm:$0xf]
        %v888 = vld [vmem:[#allocation6 + $0xa8] sm:$0xf]
        %v889 = vld [vmem:[#allocation6 + $0xac] sm:$0xf]
        %v890 = vld [vmem:[#allocation6 + $0xb0] sm:$0xf]
        %v891 = vld [vmem:[#allocation6 + $0xb4] sm:$0xf]
        %v892 = vld [vmem:[#allocation6 + $0xb8] sm:$0xf]
        %v893 = vld [vmem:[#allocation6 + $0xbc] sm:$0xf]
        %v896 = vunpack.c.l.b16 %v843
        %v897 = vunpack.c.h.b16 %v843
        %v898 = vunpack.c.l.b16 %v844
        %v899 = vpack.c.b16 %v896, %v896
        %v900 = vpack.c.b16 %v897, %v897
        %v901 = vpack.c.b16 %v898, %v898
        %v953 = vunpack.c.l.b16 %v846
        %v954 = vunpack.c.l.b16 %v847
        %v955 = vunpack.c.l.b16 %v848
        %v956 = vunpack.c.l.b16 %v849
        %v957 = vunpack.c.l.b16 %v850
        %v958 = vunpack.c.l.b16 %v851
        %v959 = vunpack.c.l.b16 %v852
        %v960 = vunpack.c.l.b16 %v853
        %v961 = vunpack.c.l.b16 %v854
        %v962 = vunpack.c.l.b16 %v855
        %v963 = vunpack.c.l.b16 %v856
        %v964 = vunpack.c.l.b16 %v857
        %v965 = vunpack.c.l.b16 %v858
        %v966 = vunpack.c.l.b16 %v859
        %v967 = vunpack.c.l.b16 %v860
        %v968 = vunpack.c.l.b16 %v861
        %v969 = vunpack.c.l.b16 %v862
        %v970 = vunpack.c.l.b16 %v863
        %v971 = vunpack.c.l.b16 %v864
        %v972 = vunpack.c.l.b16 %v865
        %v973 = vunpack.c.l.b16 %v866
        %v974 = vunpack.c.l.b16 %v867
        %v975 = vunpack.c.l.b16 %v868
        %v976 = vunpack.c.l.b16 %v869
        %v977 = vunpack.c.l.b16 %v870
        %v978 = vunpack.c.l.b16 %v871
        %v979 = vunpack.c.l.b16 %v872
        %v980 = vunpack.c.l.b16 %v873
        %v981 = vunpack.c.l.b16 %v874
        %v982 = vunpack.c.l.b16 %v875
        %v983 = vunpack.c.l.b16 %v876
        %v984 = vunpack.c.l.b16 %v877
        %v985 = vunpack.c.l.b16 %v878
        %v986 = vunpack.c.l.b16 %v879
        %v987 = vunpack.c.l.b16 %v880
        %v988 = vunpack.c.l.b16 %v881
        %v989 = vunpack.c.l.b16 %v882
        %v990 = vunpack.c.l.b16 %v883
        %v991 = vunpack.c.l.b16 %v884
        %v992 = vunpack.c.l.b16 %v885
        %v993 = vunpack.c.l.b16 %v886
        %v994 = vunpack.c.l.b16 %v887
        %v995 = vunpack.c.l.b16 %v888
        %v996 = vunpack.c.l.b16 %v889
        %v997 = vunpack.c.l.b16 %v890
        %v998 = vunpack.c.l.b16 %v891
        %v999 = vunpack.c.l.b16 %v892
        %v1000 = vunpack.c.l.b16 %v893
        %v1001 = vpack.c.b16 %v954, %v953
        %v1002 = vpack.c.b16 %v956, %v955
        %v1003 = vpack.c.b16 %v958, %v957
        %v1004 = vpack.c.b16 %v960, %v959
        %v1005 = vpack.c.b16 %v962, %v961
        %v1006 = vpack.c.b16 %v964, %v963
        %v1007 = vpack.c.b16 %v966, %v965
        %v1008 = vpack.c.b16 %v968, %v967
        %v1009 = vpack.c.b16 %v970, %v969
        %v1010 = vpack.c.b16 %v972, %v971
        %v1011 = vpack.c.b16 %v974, %v973
        %v1012 = vpack.c.b16 %v976, %v975
        %v1013 = vpack.c.b16 %v978, %v977
        %v1014 = vpack.c.b16 %v980, %v979
        %v1015 = vpack.c.b16 %v982, %v981
        %v1016 = vpack.c.b16 %v984, %v983
        %v1017 = vpack.c.b16 %v986, %v985
        %v1018 = vpack.c.b16 %v988, %v987
        %v1019 = vpack.c.b16 %v990, %v989
        %v1020 = vpack.c.b16 %v992, %v991
        %v1021 = vpack.c.b16 %v994, %v993
        %v1022 = vpack.c.b16 %v996, %v995
        %v1023 = vpack.c.b16 %v998, %v997
        %v1024 = vpack.c.b16 %v1000, %v999
        %1049 = vmatpush.bf16.msra.mxu0 %v1008
        %1050 = vmatpush.bf16.msra.mxu0 %v1007
        %1051 = vmatpush.bf16.msra.mxu0 %v1006
        %1052 = vmatpush.bf16.msra.mxu0 %v1005
        %1053 = vmatpush.bf16.msra.mxu0 %v1004
        %1054 = vmatpush.bf16.msra.mxu0 %v1003
        %1055 = vmatpush.bf16.msra.mxu0 %v1002
        %1056 = vmatpush.bf16.msra.mxu0 %v1001
        %1057 = vmatmul.bf16.gmra.mxu0 %v899
        %v1058 = vpop.f32.mrf.mxu0
        %v1059 = vadd.f32 0.0, %v1058
        %v1060 = vpop.f32.mrf.mxu0
        %1061 = vdwg.mxu0
        %1062 = vmatpush.bf16.msra.mxu0 %v1016
        %1063 = vmatpush.bf16.msra.mxu0 %v1015
        %1064 = vmatpush.bf16.msra.mxu0 %v1014
        %1065 = vmatpush.bf16.msra.mxu0 %v1013
        %1066 = vmatpush.bf16.msra.mxu0 %v1012
        %1067 = vmatpush.bf16.msra.mxu0 %v1011
        %1068 = vmatpush.bf16.msra.mxu0 %v1010
        %1069 = vmatpush.bf16.msra.mxu0 %v1009
        %1070 = vmatmul.bf16.gmra.mxu0 %v900
        %v1071 = vpop.f32.mrf.mxu0
        %v1072 = vadd.f32 %v1059, %v1071
        %v1073 = vpop.f32.mrf.mxu0
        %1074 = vdwg.mxu0
        %1075 = vmatpush.bf16.msra.mxu0 %v1024
        %1076 = vmatpush.bf16.msra.mxu0 %v1023
        %1077 = vmatpush.bf16.msra.mxu0 %v1022
        %1078 = vmatpush.bf16.msra.mxu0 %v1021
        %1079 = vmatpush.bf16.msra.mxu0 %v1020
        %1080 = vmatpush.bf16.msra.mxu0 %v1019
        %1081 = vmatpush.bf16.msra.mxu0 %v1018
        %1082 = vmatpush.bf16.msra.mxu0 %v1017
        %1083 = vmatmul.bf16.gmra.mxu0 %v901
        %v1084 = vpop.f32.mrf.mxu0
        %v1085 = vadd.f32 %v1072, %v1084
        %v1086 = vpop.f32.mrf.mxu0
        %1087 = vdwg.mxu0
        %1088 = vst [vmem:[%s379] sm:$0xff] %v1085
        %v1090 = vunpack.c.h.b16 %v844
        %v1091 = vunpack.c.l.b16 %v845
        %v1092 = vunpack.c.h.b16 %v845
        %v1093 = vpack.c.b16 %v1090, %v1090
        %v1094 = vpack.c.b16 %v1091, %v1091
        %v1095 = vpack.c.b16 %v1092, %v1092
        %1099 = vmatpush.bf16.msra.mxu0 %v1008
        %1100 = vmatpush.bf16.msra.mxu0 %v1007
        %1101 = vmatpush.bf16.msra.mxu0 %v1006
        %1102 = vmatpush.bf16.msra.mxu0 %v1005
        %1103 = vmatpush.bf16.msra.mxu0 %v1004
        %1104 = vmatpush.bf16.msra.mxu0 %v1003
        %1105 = vmatpush.bf16.msra.mxu0 %v1002
        %1106 = vmatpush.bf16.msra.mxu0 %v1001
        %1107 = vmatmul.bf16.gmra.mxu0 %v1093
        %v1108 = vpop.f32.mrf.mxu0
        %v1109 = vadd.f32 0.0, %v1108
        %v1110 = vpop.f32.mrf.mxu0
        %1111 = vdwg.mxu0
        %1112 = vmatpush.bf16.msra.mxu0 %v1016
        %1113 = vmatpush.bf16.msra.mxu0 %v1015
        %1114 = vmatpush.bf16.msra.mxu0 %v1014
        %1115 = vmatpush.bf16.msra.mxu0 %v1013
        %1116 = vmatpush.bf16.msra.mxu0 %v1012
        %1117 = vmatpush.bf16.msra.mxu0 %v1011
        %1118 = vmatpush.bf16.msra.mxu0 %v1010
        %1119 = vmatpush.bf16.msra.mxu0 %v1009
        %1120 = vmatmul.bf16.gmra.mxu0 %v1094
        %v1121 = vpop.f32.mrf.mxu0
        %v1122 = vadd.f32 %v1109, %v1121
        %v1123 = vpop.f32.mrf.mxu0
        %1124 = vdwg.mxu0
        %1125 = vmatpush.bf16.msra.mxu0 %v1024
        %1126 = vmatpush.bf16.msra.mxu0 %v1023
        %1127 = vmatpush.bf16.msra.mxu0 %v1022
        %1128 = vmatpush.bf16.msra.mxu0 %v1021
        %1129 = vmatpush.bf16.msra.mxu0 %v1020
        %1130 = vmatpush.bf16.msra.mxu0 %v1019
        %1131 = vmatpush.bf16.msra.mxu0 %v1018
        %1132 = vmatpush.bf16.msra.mxu0 %v1017
        %1133 = vmatmul.bf16.gmra.mxu0 %v1095
        %v1134 = vpop.f32.mrf.mxu0
        %v1135 = vadd.f32 %v1122, %v1134
        %v1136 = vpop.f32.mrf.mxu0
        %1137 = vdwg.mxu0
        %1138 = vst [vmem:[%s379 + $0x8] sm:$0xff] %v1135
        %s1139 = sand.u32 %s224, 1
        %s1140 = scalar_lea.sflag [#allocation4], %s1139
        %s1141 = sand.u32 %s224, 1
        %s1142 = smul.addr %s1141, 16
        %s1143 = scalar_lea.vmem [#allocation9], %s1142
        // Predicated region
        $region65: #{tpu_custom_call.1} parent=51 // pred_check
          %p1144 = pneg %p234
        $region66: #{tpu_custom_call.1} parent=51 // pred_check_branch
          %1146 = sbr.rel (%p1144) target = $region68
        $region67: #{tpu_custom_call.1} parent=51 // pred_region
          %s1147 = smul.u32 2, %s32
          %s1148 = ssub.s32 3, %s1147
          %p1149 = scmp.lt.s32.totalorder %s1148, 2
          %s1150 = scalar_select %p1149, %s1148, 2
          %s1151 = smul.u32 8, %s1150
          %s1152 = ssub.s32 16, %s1151
          %s1153 = sshll.u32 %s1152, 4
          %1154 = vsyncadd %s1140, %s1153
          %p1155 = scmp.ne.s32.totalorder 0, %s1151
          %s1156 = smul.addr %s31, 3
          %s1157 = sadd.s32 %s1147, %s1156
          %s1158 = smul.addr %s1157, 8
          %s1159 = scalar_lea.hbm %s8, %s1158
          %s1160 = smul.u32 %s1150, 8
          %s1161 = sshll.u32 %s1160, 4
          %s1162 = sshll.u32 %s1143, 4
          %s1163 = int_to_ptr.vmem [resolvable:$true] %s1162
          %s1164 = sshll.u32 %s1159, 4
          %s1165 = int_to_ptr.hbm [resolvable:$true] %s1164
          %1167 = dma.vmem_to_hbm [thread:$0]  (%p1155), %s1163, %s1161, %s1165, %s1140
        $region68: #{tpu_custom_call.1} parent=51 // pred_fallthru
          _
      $region52: #{tpu_custom_call.1} parent=5 // pred_fallthru
        _
      %p1168 = scmp.le.s32.totalorder 2, %s22
      // Predicated region
      $region69: #{tpu_custom_call.1} parent=5 // pred_check
        %p1169 = pneg %p1168
      $region70: #{tpu_custom_call.1} parent=5 // pred_check_branch
        %1171 = sbr.rel (%p1169) target = $region72
      $region71: #{tpu_custom_call.1} parent=5 // pred_region
        %s1172 = ssub.s32 %s22, 2
        // Predicated region
        $region73: #{tpu_custom_call.1} parent=71 // pred_check
          %p1173 = pneg %p240
        $region74: #{tpu_custom_call.1} parent=71 // pred_check_branch
          %1175 = sbr.rel (%p1173) target = $region76
        $region75: #{tpu_custom_call.1} parent=71 // pred_region
          %s1176 = sand.u32 %s225, 1
          %s1177 = scalar_lea.sflag [#allocation4], %s1176
          %s1178 = sand.u32 %s225, 1
          %s1179 = smul.addr %s1178, 16
          %s1180 = scalar_lea.vmem [#allocation9], %s1179
          %1182 = dma.done %s1177, 256
        $region76: #{tpu_custom_call.1} parent=71 // pred_fallthru
          _
      $region72: #{tpu_custom_call.1} parent=5 // pred_fallthru
        _
    $region6: #{tpu_custom_call.1} parent=1 // loop_footer
      %s26 = sadd.s32 1, %s22
    $region7: #{tpu_custom_call.1} parent=1 // loop_footer_branch
      %21 = sbr.rel target = $region3
    $region8: #{tpu_custom_call.1} parent=1 // loop_exit
      _
    %1183 = vsyncpa [#allocation3], 1
    %s1184 = scalar_lea.sflag [#allocation3], 1
    %1185 = vsyncpa %s1184, 1
    %1186 = vsyncpa [#allocation7], 1
    %1187 = vsyncpa [#allocation4], 1
    %s1188 = scalar_lea.sflag [#allocation4], 1
    %1189 = vsyncpa %s1188, 1
    %1190 = vsyncpa [#allocation5], 1
    %s1191 = scalar_lea.sflag [#allocation5], 1
    %1192 = vsyncpa %s1191, 1

</llo_original>
